<compile_context>
chip_gen: v7x
topology: tpu7x:2x2x1
jax: 0.10.0
libtpu: 0.0.40
codegen_flags: <defaults>
</compile_context>

<pallas_src>
import functools

import jax
import jax.numpy as jnp
from jax.experimental import pallas as pl
from jax.experimental.pallas import tpu as pltpu

LN_EPS = 1e-5  # torch.nn.LayerNorm default


def _round_up(a, m):
    return ((a + m - 1) // m) * m


def _pad_rows(x2, tile):
    rows = x2.shape[0]
    rows_p = _round_up(rows, tile)
    if rows_p != rows:
        x2 = jnp.pad(x2, ((0, rows_p - rows), (0, 0)))
    return x2


def _vmem_limit(need_bytes):
    # generous but capped so it is valid on v7x's 64 MiB physical VMEM
    return min(max(2 * need_bytes + (8 << 20), 32 << 20), 64 << 20)


# --------------------------------------------------------------------------
# Kernel 1: y = x @ W^T + b  (optional fused ReLU).  Grid = (M, N, K) tiles.
# --------------------------------------------------------------------------
def _linear_kernel(x_ref, wt_ref, b_ref, o_ref, acc_ref, *, relu):
    k = pl.program_id(2)

    @pl.when(k == 0)
    def _init():
        acc_ref[...] = jnp.zeros_like(acc_ref)

    acc_ref[...] += jnp.dot(x_ref[...], wt_ref[...], preferred_element_type=jnp.float32)

    @pl.when(k == pl.num_programs(2) - 1)
    def _finalize():
        y = acc_ref[...] + b_ref[...].astype(jnp.float32)
        if relu:
            y = jnp.maximum(y, 0.0)
        o_ref[...] = y.astype(o_ref.dtype)


def pallas_linear(x, w, b, *, relu=False, tm_max=256, tn_max=1024, tk_max=256):
    """x: (..., K); w: (N, K) PyTorch Linear weight; b: (N,)."""
    *lead, K = x.shape
    N, K2 = w.shape
    assert K == K2 and K % 128 == 0 and N % 128 == 0
    x2 = x.reshape(-1, K)
    M = x2.shape[0]

    tm = tm_max if M >= tm_max else _round_up(M, 8)
    x2p = _pad_rows(x2, tm)
    Mp = x2p.shape[0]
    tn = N if N <= tn_max else (512 if N % 512 == 0 else 256 if N % 256 == 0 else 128)
    tk = K if K <= tk_max else (tk_max if K % tk_max == 0 else 128)

    wt = w.T                       # (K, N)
    b2 = b.reshape(1, N)

    need = 2 * (tm * tk + tk * tn + tn + tm * tn) * 4 + tm * tn * 4
    out = pl.pallas_call(
        functools.partial(_linear_kernel, relu=relu),
        out_shape=jax.ShapeDtypeStruct((Mp, N), x.dtype),
        grid_spec=pltpu.PrefetchScalarGridSpec(
            num_scalar_prefetch=0,
            grid=(Mp // tm, N // tn, K // tk),
            in_specs=[
                pl.BlockSpec((tm, tk), lambda i, j, k: (i, k)),
                pl.BlockSpec((tk, tn), lambda i, j, k: (k, j)),
                pl.BlockSpec((1, tn), lambda i, j, k: (0, j)),
            ],
            out_specs=pl.BlockSpec((tm, tn), lambda i, j, k: (i, j)),
            scratch_shapes=[pltpu.VMEM((tm, tn), jnp.float32)],
        ),
        compiler_params=pltpu.CompilerParams(
            dimension_semantics=("parallel", "parallel", "arbitrary"),
            vmem_limit_bytes=_vmem_limit(need),
        ),
    )(x2p, wt, b2)
    return out[:M].reshape(*lead, N)


# --------------------------------------------------------------------------
# Kernel 2: LayerNorm(residual + lhs @ W^T + b)   (fused Residual block).
# Grid = (row tiles, K tiles); K is the reduction axis (last, "arbitrary").
# --------------------------------------------------------------------------
def _linear_residual_ln_kernel(x_ref, res_ref, wt_ref, affine_ref, o_ref, acc_ref):
    k = pl.program_id(1)

    @pl.when(k == 0)
    def _init():
        acc_ref[...] = jnp.zeros_like(acc_ref)

    acc_ref[...] += jnp.dot(x_ref[...], wt_ref[...], preferred_element_type=jnp.float32)

    @pl.when(k == pl.num_programs(1) - 1)
    def _finalize():
        bias = affine_ref[0:1, :].astype(jnp.float32)    # (1, D)
        gamma = affine_ref[1:2, :].astype(jnp.float32)   # (1, D)
        beta = affine_ref[2:3, :].astype(jnp.float32)    # (1, D)

        # dropout == identity in eval mode
        z = res_ref[...].astype(jnp.float32) + acc_ref[...] + bias
        mean = jnp.mean(z, axis=-1, keepdims=True)
        c = z - mean
        var = jnp.mean(c * c, axis=-1, keepdims=True)
        z_hat = c * jax.lax.rsqrt(var + LN_EPS)
        o_ref[...] = (z_hat * gamma + beta).astype(o_ref.dtype)


def pallas_linear_residual_ln(lhs, residual, w, b, gamma, beta, *, tm_max=256, tk_max=256):
    """lhs: (..., K); residual: (..., D); w: (D, K).  Returns LN(residual + lhs@w.T + b)."""
    *lead, K = lhs.shape
    D = residual.shape[-1]
    N, K2 = w.shape
    assert N == D and K == K2 and K % 128 == 0 and D % 128 == 0

    l2 = lhs.reshape(-1, K)
    r2 = residual.reshape(-1, D)
    M = l2.shape[0]
    tm = tm_max if M >= tm_max else _round_up(M, 8)
    l2p = _pad_rows(l2, tm)
    r2p = _pad_rows(r2, tm)
    Mp = l2p.shape[0]
    tk = K if K <= tk_max else (tk_max if K % tk_max == 0 else 128)

    wt = w.T                                                   # (K, D)
    affine = jnp.stack([b, gamma, beta]).astype(jnp.float32)   # (3, D) folded invariants

    need = 2 * (tm * tk + tm * D + tk * D + 3 * D + tm * D) * 4 + tm * D * 4
    out = pl.pallas_call(
        _linear_residual_ln_kernel,
        out_shape=jax.ShapeDtypeStruct((Mp, D), residual.dtype),
        grid_spec=pltpu.PrefetchScalarGridSpec(
            num_scalar_prefetch=0,
            grid=(Mp // tm, K // tk),
            in_specs=[
                pl.BlockSpec((tm, tk), lambda i, k: (i, k)),   # lhs K-chunk (MXU LHS)
                pl.BlockSpec((tm, D), lambda i, k: (i, 0)),    # residual rows
                pl.BlockSpec((tk, D), lambda i, k: (k, 0)),    # W^T K-block
                pl.BlockSpec((3, D), lambda i, k: (0, 0)),     # [bias; gamma; beta]
            ],
            out_specs=pl.BlockSpec((tm, D), lambda i, k: (i, 0)),
            scratch_shapes=[pltpu.VMEM((tm, D), jnp.float32)],
        ),
        compiler_params=pltpu.CompilerParams(
            dimension_semantics=("parallel", "arbitrary"),
            vmem_limit_bytes=_vmem_limit(need),
        ),
    )(l2p, r2p, wt, affine)
    return out[:M].reshape(*lead, D)


# --------------------------------------------------------------------------
# Kernel 3: masked softmax attention, one (batch*head) slab per grid step.
# --------------------------------------------------------------------------
def _attention_kernel(q_ref, k_ref, v_ref, mask_ref, o_ref, *, scale):
    q = q_ref[0].astype(jnp.float32)     # (S, dk)
    k = k_ref[0].astype(jnp.float32)     # (S, dk)
    v = v_ref[0].astype(jnp.float32)     # (S, dk)
    m = mask_ref[0]                      # (S, S)

    s = jax.lax.dot_general(q, k, (((1,), (1,)), ((), ())),
                            preferred_element_type=jnp.float32)     # q @ k^T
    s = jnp.where(m == 0.0, jnp.float32(-1e20), s) * (1.0 / scale)  # mask-fill, then scale
    s_max = jnp.max(s, axis=-1, keepdims=True)
    p = jnp.exp(s - s_max)
    p = p / jnp.sum(p, axis=-1, keepdims=True)
    o_ref[0] = jnp.dot(p, v, preferred_element_type=jnp.float32).astype(o_ref.dtype)


def pallas_attention(q, k, v, mask, *, num_heads, scale):
    """q/k/v: (B*H, S, dk); mask: (B, S, S)."""
    BH, S, dk = q.shape
    return pl.pallas_call(
        functools.partial(_attention_kernel, scale=scale),
        out_shape=jax.ShapeDtypeStruct((BH, S, dk), q.dtype),
        grid_spec=pltpu.PrefetchScalarGridSpec(
            num_scalar_prefetch=0,
            grid=(BH,),
            in_specs=[
                pl.BlockSpec((1, S, dk), lambda i: (i, 0, 0)),
                pl.BlockSpec((1, S, dk), lambda i: (i, 0, 0)),
                pl.BlockSpec((1, S, dk), lambda i: (i, 0, 0)),
                pl.BlockSpec((1, S, S), lambda i: (i // num_heads, 0, 0)),
            ],
            out_specs=pl.BlockSpec((1, S, dk), lambda i: (i, 0, 0)),
        ),
        compiler_params=pltpu.CompilerParams(dimension_semantics=("parallel",)),
    )(q, k, v, mask)


# --------------------------------------------------------------------------
# Kernel 4: row-wise softmax over the vocab dim.
# --------------------------------------------------------------------------
def _softmax_kernel(x_ref, o_ref):
    x = x_ref[...].astype(jnp.float32)
    x_max = jnp.max(x, axis=-1, keepdims=True)
    e = jnp.exp(x - x_max)
    o_ref[...] = (e / jnp.sum(e, axis=-1, keepdims=True)).astype(o_ref.dtype)


def pallas_softmax(x, *, tm_max=256):
    *lead, V = x.shape
    assert V % 128 == 0
    x2 = x.reshape(-1, V)
    M = x2.shape[0]
    tm = tm_max if M >= tm_max else _round_up(M, 8)
    x2p = _pad_rows(x2, tm)
    Mp = x2p.shape[0]
    out = pl.pallas_call(
        _softmax_kernel,
        out_shape=jax.ShapeDtypeStruct((Mp, V), x.dtype),
        grid_spec=pltpu.PrefetchScalarGridSpec(
            num_scalar_prefetch=0,
            grid=(Mp // tm,),
            in_specs=[pl.BlockSpec((tm, V), lambda i: (i, 0))],
            out_specs=pl.BlockSpec((tm, V), lambda i: (i, 0)),
        ),
        compiler_params=pltpu.CompilerParams(dimension_semantics=("parallel",)),
    )(x2p)
    return out[:M].reshape(*lead, V)


# --------------------------------------------------------------------------
# Model wrapper (mirrors Decoder.forward)
# --------------------------------------------------------------------------
def position_encoding(seq_len, dim_model):
    pos = jnp.arange(seq_len, dtype=jnp.float32).reshape(1, -1, 1)
    dim = jnp.arange(dim_model, dtype=jnp.float32).reshape(1, 1, -1)
    phase = pos / jnp.power(10000.0, dim / dim_model)
    even = (jnp.arange(dim_model).reshape(1, 1, -1) % 2) == 0
    return jnp.where(even, jnp.sin(phase), jnp.cos(phase))


def decoder_layer_forward(x, mask, p, *, num_heads):
    B, S, D = x.shape
    Hdk = p["w_qkv"].shape[0] // 3
    dk = Hdk // num_heads

    # Fused per-head Q/K/V projections as one (3*H*dk, D) matmul.
    qkv = pallas_linear(x, p["w_qkv"], p["b_qkv"])
    q, k, v = jnp.split(qkv, 3, axis=-1)

    def to_heads(t):
        return t.reshape(B, S, num_heads, dk).transpose(0, 2, 1, 3).reshape(B * num_heads, S, dk)

    attn = pallas_attention(to_heads(q), to_heads(k), to_heads(v), mask,
                            num_heads=num_heads, scale=float(dk) ** 0.5)
    attn = attn.reshape(B, num_heads, S, dk).transpose(0, 2, 1, 3).reshape(B, S, Hdk)

    # Residual #1: output projection + residual + LayerNorm, fused.
    x = pallas_linear_residual_ln(attn, x, p["w_o"], p["b_o"], p["ln1_g"], p["ln1_b"])
    # Feed-forward: Linear+ReLU fused, then Linear + residual + LayerNorm fused.
    h = pallas_linear(x, p["w_ff1"], p["b_ff1"], relu=True)
    x = pallas_linear_residual_ln(h, x, p["w_ff2"], p["b_ff2"], p["ln2_g"], p["ln2_b"])
    return x


def decoder_forward(src_ids, params, *, num_heads):
    # TODO(synk): gensim Word2Vec embedding (file-backed) replaced by an in-memory table lookup.
    x = jnp.take(params["embedding"], src_ids, axis=0)          # (B, S, D)
    B, S, D = x.shape
    x = x + position_encoding(S, D)
    mask = jnp.broadcast_to(jnp.tril(jnp.ones((S, S), jnp.float32)), (B, S, S))
    for p in params["layers"]:
        x = decoder_layer_forward(x, mask, p, num_heads=num_heads)
    logits = pallas_linear(x, params["out_w"], params["out_b"])
    return pallas_softmax(logits)


# --------------------------------------------------------------------------
# Pure-JAX reference for the correctness check
# --------------------------------------------------------------------------
def _layer_norm_ref(z, g, b):
    mean = jnp.mean(z, axis=-1, keepdims=True)
    var = jnp.mean((z - mean) ** 2, axis=-1, keepdims=True)
    return (z - mean) / jnp.sqrt(var + LN_EPS) * g + b


def _reference_decoder(src_ids, params, *, num_heads):
    x = jnp.take(params["embedding"], src_ids, axis=0)
    B, S, D = x.shape
    x = x + position_encoding(S, D)
    mask = jnp.broadcast_to(jnp.tril(jnp.ones((S, S), jnp.float32)), (B, S, S))

    def linear(t, w, b):
        return jnp.einsum("bsd,nd->bsn", t, w) + b

    for p in params["layers"]:
        qkv = linear(x, p["w_qkv"], p["b_qkv"])
        q, k, v = jnp.split(qkv, 3, axis=-1)
        Hdk = q.shape[-1]
        dk = Hdk // num_heads

        def heads(t):
            return t.reshape(B, S, num_heads, dk).transpose(0, 2, 1, 3)

        qh, kh, vh = heads(q), heads(k), heads(v)
        s = jnp.einsum("bhqd,bhkd->bhqk", qh, kh)
        s = jnp.where(mask[:, None, :, :] == 0, -1e20, s)
        p_attn = jax.nn.softmax(s / (float(dk) ** 0.5), axis=-1)
        attn = jnp.einsum("bhqk,bhkd->bhqd", p_attn, vh)
        attn = attn.transpose(0, 2, 1, 3).reshape(B, S, Hdk)
        x = _layer_norm_ref(x + linear(attn, p["w_o"], p["b_o"]), p["ln1_g"], p["ln1_b"])
        h = jax.nn.relu(linear(x, p["w_ff1"], p["b_ff1"]))
        x = _layer_norm_ref(x + linear(h, p["w_ff2"], p["b_ff2"]), p["ln2_g"], p["ln2_b"])

    logits = linear(x, params["out_w"], params["out_b"])
    return jax.nn.softmax(logits, axis=-1)


if __name__ == "__main__":
    # Small, TPU-friendly shapes (feature dims are multiples of 128 for lane-dense stores).
    B, S = 2, 16
    D = 256      # dim_model (embedding size)
    H = 4        # num_heads -> dim_q = dim_k = 64
    F = 512      # dim_feedforward
    L = 2        # num_layers
    V = 384      # corpus_length (vocab)

    key = jax.random.PRNGKey(0)
    keys = iter(jax.random.split(key, 64))

    def init(shape, scale):
        return scale * jax.random.normal(next(keys), shape, dtype=jnp.float32)

    params = {
        "embedding": init((V, D), 1.0),
        "layers": [],
        "out_w": init((V, D), D ** -0.5),
        "out_b": init((V,), 0.02),
    }
    for _ in range(L):
        params["layers"].append({
            "w_qkv": init((3 * D, D), D ** -0.5),   # concat of per-head q/k/v Linear weights
            "b_qkv": init((3 * D,), 0.02),
            "w_o": init((D, D), D ** -0.5),
            "b_o": init((D,), 0.02),
            "ln1_g": 1.0 + init((D,), 0.02),
            "ln1_b": init((D,), 0.02),
            "w_ff1": init((F, D), D ** -0.5),
            "b_ff1": init((F,), 0.02),
            "w_ff2": init((D, F), F ** -0.5),
            "b_ff2": init((D,), 0.02),
            "ln2_g": 1.0 + init((D,), 0.02),
            "ln2_b": init((D,), 0.02),
        })

    src_ids = jax.random.randint(next(keys), (B, S), 0, V, dtype=jnp.int32)

    out = decoder_forward(src_ids, params, num_heads=H)
    out = jax.block_until_ready(out)

    ref = _reference_decoder(src_ids, params, num_heads=H)
    assert out.shape == (B, S, V)
    assert bool(jnp.all(jnp.isfinite(out)))
    assert jnp.allclose(jnp.sum(out, axis=-1), 1.0, atol=1e-4)
    assert jnp.allclose(out, ref, atol=1e-4, rtol=1e-3), "mismatch vs reference"

    print("KERNEL_OK")
</pallas_src>

<mosaic_0001>
module attributes {stable_mosaic.version = 11 : i64} {
  func.func @_linear_kernel(%arg0: i32, %arg1: i32, %arg2: i32, %arg3: memref<32x256xf32, #tpu.memory_space<vmem>>, %arg4: memref<256x768xf32, #tpu.memory_space<vmem>>, %arg5: memref<1x768xf32, #tpu.memory_space<vmem>>, %arg6: memref<32x768xf32, #tpu.memory_space<vmem>>, %arg7: memref<32x768xf32, #tpu.memory_space<vmem>>) attributes {dimension_semantics = [#tpu.dimension_semantics<parallel>, #tpu.dimension_semantics<parallel>, #tpu.dimension_semantics<arbitrary>], iteration_bounds = array<i64: 1, 1, 1>, scalar_prefetch = 0 : i64, scratch_operands = 1 : i64, tpu.core_type = #tpu.core_type<tc>, window_params = [{transform_indices = @transform_0, window_bounds = array<i64: 32, 256>}, {transform_indices = @transform_1, window_bounds = array<i64: 256, 768>}, {transform_indices = @transform_2, window_bounds = array<i64: 1, 768>}, {transform_indices = @transform_3, window_bounds = array<i64: 32, 768>}]} {
    %c0_i32 = arith.constant 0 : i32
    %0 = arith.cmpi eq, %arg2, %c0_i32 : i32
    %1 = arith.extui %0 : i1 to i32
    %c0_i32_0 = arith.constant 0 : i32
    %2 = arith.cmpi ne, %1, %c0_i32_0 : i32
    scf.if %2 {
      %cst_10 = arith.constant 0.000000e+00 : f32
      %12 = vector.broadcast %cst_10 : f32 to vector<32x768xf32>
      %c0_11 = arith.constant 0 : index
      %c0_12 = arith.constant 0 : index
      %13 = vector.load %arg7[%c0_11, %c0_12] : memref<32x768xf32, #tpu.memory_space<vmem>>, vector<32x768xf32>
      tpu.vector_store %arg7[%c0_11, %c0_12], %12 {strides = array<i32>} : memref<32x768xf32, #tpu.memory_space<vmem>>, vector<32x768xf32>,
    } else {
    }
    %c0 = arith.constant 0 : index
    %c0_1 = arith.constant 0 : index
    %3 = vector.load %arg7[%c0, %c0_1] : memref<32x768xf32, #tpu.memory_space<vmem>>, vector<32x768xf32>
    %c0_2 = arith.constant 0 : index
    %c0_3 = arith.constant 0 : index
    %4 = vector.load %arg3[%c0_2, %c0_3] : memref<32x256xf32, #tpu.memory_space<vmem>>, vector<32x256xf32>
    %c0_4 = arith.constant 0 : index
    %c0_5 = arith.constant 0 : index
    %5 = vector.load %arg4[%c0_4, %c0_5] : memref<256x768xf32, #tpu.memory_space<vmem>>, vector<256x768xf32>
    %cst = arith.constant dense<0.000000e+00> : vector<32x768xf32>
    %6 = tpu.matmul %4, %5, %cst {dimension_numbers = #tpu.dot_dimension_numbers<[1], [0], [0], [1], [0, 0, 1, 1], [], []>} : vector<32x256xf32>, vector<256x768xf32>, vector<32x768xf32> -> vector<32x768xf32>
    %7 = arith.addf %3, %6 : vector<32x768xf32>
    %c0_6 = arith.constant 0 : index
    %c0_7 = arith.constant 0 : index
    %8 = vector.load %arg7[%c0_6, %c0_7] : memref<32x768xf32, #tpu.memory_space<vmem>>, vector<32x768xf32>
    tpu.vector_store %arg7[%c0_6, %c0_7], %7 {strides = array<i32>} : memref<32x768xf32, #tpu.memory_space<vmem>>, vector<32x768xf32>,
    %c0_i32_8 = arith.constant 0 : i32
    %9 = arith.cmpi eq, %arg2, %c0_i32_8 : i32
    %10 = arith.extui %9 : i1 to i32
    %c0_i32_9 = arith.constant 0 : i32
    %11 = arith.cmpi ne, %10, %c0_i32_9 : i32
    scf.if %11 {
      %c0_10 = arith.constant 0 : index
      %c0_11 = arith.constant 0 : index
      %12 = vector.load %arg7[%c0_10, %c0_11] : memref<32x768xf32, #tpu.memory_space<vmem>>, vector<32x768xf32>
      %c0_12 = arith.constant 0 : index
      %c0_13 = arith.constant 0 : index
      %13 = vector.load %arg5[%c0_12, %c0_13] : memref<1x768xf32, #tpu.memory_space<vmem>>, vector<1x768xf32>
      %14 = vector.broadcast %13 : vector<1x768xf32> to vector<32x768xf32>
      %15 = arith.addf %12, %14 : vector<32x768xf32>
      %c0_14 = arith.constant 0 : index
      %c0_15 = arith.constant 0 : index
      %16 = vector.load %arg6[%c0_14, %c0_15] : memref<32x768xf32, #tpu.memory_space<vmem>>, vector<32x768xf32>
      tpu.vector_store %arg6[%c0_14, %c0_15], %15 {strides = array<i32>} : memref<32x768xf32, #tpu.memory_space<vmem>>, vector<32x768xf32>,
    } else {
    }
    return
  }
  func.func @transform_0(%arg0: i32, %arg1: i32, %arg2: i32) -> (i32, i32) {
    %c0_i32 = arith.constant 0 : i32
    return %arg0, %arg2 : i32, i32
  }
  func.func @transform_1(%arg0: i32, %arg1: i32, %arg2: i32) -> (i32, i32) {
    %c0_i32 = arith.constant 0 : i32
    return %arg2, %arg1 : i32, i32
  }
  func.func @transform_2(%arg0: i32, %arg1: i32, %arg2: i32) -> (i32, i32) {
    %c0_i32 = arith.constant 0 : i32
    %c0_i32_0 = arith.constant 0 : i32
    return %c0_i32, %arg1 : i32, i32
  }
  func.func @transform_3(%arg0: i32, %arg1: i32, %arg2: i32) -> (i32, i32) {
    %c0_i32 = arith.constant 0 : i32
    return %arg0, %arg1 : i32, i32
  }
}

</mosaic_0001>

<llo_original>
// kernel: tpu_custom_call.1
$region0: #{tpu_custom_call.1}
  #allocation0 [shape = 'u32[]', space=smem, size = 0x4, offset = 0x4, fixed_abs, tag = 'smem constant byte address 0x4 - core index']
  #allocation1 [shape = 'u32[144,128]{1,0:T(1,128)}', space=vmem, size = 0x12000, scoped, tag = 'internal scratch']
  #allocation2 [shape = 'f32[32,768]{1,0:T(8,128)}', space=vmem, size = 0x18000, scoped, tag = 'scratch operand']
  %s0 = inlined_call_operand.hbm [shape: f32[32,256], index: 0, kind: input, shape index: {}]
  %s1 = inlined_call_operand.hbm [shape: f32[256,768], index: 1, kind: input, shape index: {}]
  %s2 = inlined_call_operand.vmem [shape: f32[1,768], index: 2, kind: input, shape index: {}]
  %s3 = inlined_call_operand.hbm [shape: f32[32,768], index: 3, kind: output, shape index: {}]
  %s4 = sld [smem:[#allocation0]]
  $region38: #{tpu_custom_call.1} parent=0
    _
  %s6 = ssub.s32 1, %s4
  %s7 = scalar_select 0, %s6, %s4
  $region1: #{tpu_custom_call.1} parent=0
    #allocation3 [shape = 'u8[32768]{0}', space=vmem, size = 0x8000, scoped, tag = 'input window, operand 0, single buffered']
    #allocation4 [shape = 's32[1]{0}', space=sflag, size = 0x4, scoped, tag = 'scoped memory for tpu_custom_call.1']
    #allocation5 [shape = 's32[1]{0}', space=sflag, size = 0x4, scoped, tag = 'scoped memory for tpu_custom_call.1']
    #allocation6 [shape = 'u8[786432]{0}', space=vmem, size = 0xc0000, scoped, tag = 'input window, operand 1, single buffered']
    #allocation7 [shape = 's32[1]{0}', space=sflag, size = 0x4, scoped, tag = 'scoped memory for tpu_custom_call.1']
    #allocation8 [shape = 'u8[98304]{0}', space=vmem, size = 0x18000, scoped, tag = 'output window, operand 0, single buffered']
    %8 = vsyncpa [#allocation4], 0
    %9 = vsyncpa [#allocation7], 0
    %10 = vsyncpa [#allocation5], 0
    // Predicated region
    $region2: #{tpu_custom_call.1} parent=1 // pred_check
      _
    $region3: #{tpu_custom_call.1} parent=1 // pred_check_branch
      %12 = sbr.rel (0) target = $region5
    $region4: #{tpu_custom_call.1} parent=1 // pred_region
      %s14 = ssub.s32 1024, 1024
      %15 = vsyncadd [#allocation4], %s14
      %s16 = sshll.u32 [#allocation3], 4
      %s17 = int_to_ptr.vmem [resolvable:$true] %s16
      %22 = dma.hbm_to_vmem [thread:$0]  %s0, 1024, %s17, [#allocation4], 256, 256, 16
    $region5: #{tpu_custom_call.1} parent=1 // pred_fallthru
      _
    // Predicated region
    $region6: #{tpu_custom_call.1} parent=1 // pred_check
      _
    $region7: #{tpu_custom_call.1} parent=1 // pred_check_branch
      %24 = sbr.rel (0) target = $region9
    $region8: #{tpu_custom_call.1} parent=1 // pred_region
      %s26 = ssub.s32 24576, 24576
      %27 = vsyncadd [#allocation7], %s26
      %s28 = sshll.u32 [#allocation6], 4
      %s29 = int_to_ptr.vmem [resolvable:$true] %s28
      %34 = dma.hbm_to_vmem [thread:$0]  %s1, 24576, %s29, [#allocation7], 768, 768, 48
    $region9: #{tpu_custom_call.1} parent=1 // pred_fallthru
      _
    // Predicated region
    $region10: #{tpu_custom_call.1} parent=1 // pred_check
      _
    $region11: #{tpu_custom_call.1} parent=1 // pred_check_branch
      %36 = sbr.rel (0) target = $region13
    $region12: #{tpu_custom_call.1} parent=1 // pred_region
      _
    $region13: #{tpu_custom_call.1} parent=1 // pred_fallthru
      _
    // Predicated region
    $region14: #{tpu_custom_call.1} parent=1 // pred_check
      _
    $region15: #{tpu_custom_call.1} parent=1 // pred_check_branch
      %38 = sbr.rel (0) target = $region17
    $region16: #{tpu_custom_call.1} parent=1 // pred_region
      %39 = dma.done [#allocation4], 1024
    $region17: #{tpu_custom_call.1} parent=1 // pred_fallthru
      _
    // Predicated region
    $region18: #{tpu_custom_call.1} parent=1 // pred_check
      _
    $region19: #{tpu_custom_call.1} parent=1 // pred_check_branch
      %41 = sbr.rel (0) target = $region21
    $region20: #{tpu_custom_call.1} parent=1 // pred_region
      %42 = dma.done [#allocation7], 24576
    $region21: #{tpu_custom_call.1} parent=1 // pred_fallthru
      _
    %p43 = scmp.eq.s32.totalorder 0, 0
    // Predicated region
    $region22: #{tpu_custom_call.1} parent=1 // pred_check
      %p44 = pneg %p43
    $region23: #{tpu_custom_call.1} parent=1 // pred_check_branch
      %46 = sbr.rel (%p44) target = $region25
    $region24: #{tpu_custom_call.1} parent=1 // pred_region
      %47 = vst [vmem:[#allocation2] sm:$0xff] 0.0
      %48 = vst [vmem:[#allocation2 + $0x8] sm:$0xff] 0.0
      %49 = vst [vmem:[#allocation2 + $0x10] sm:$0xff] 0.0
      %50 = vst [vmem:[#allocation2 + $0x18] sm:$0xff] 0.0
      %51 = vst [vmem:[#allocation2 + $0x20] sm:$0xff] 0.0
      %52 = vst [vmem:[#allocation2 + $0x28] sm:$0xff] 0.0
      %53 = vst [vmem:[#allocation2 + $0x30] sm:$0xff] 0.0
      %54 = vst [vmem:[#allocation2 + $0x38] sm:$0xff] 0.0
      %55 = vst [vmem:[#allocation2 + $0x40] sm:$0xff] 0.0
      %56 = vst [vmem:[#allocation2 + $0x48] sm:$0xff] 0.0
      %57 = vst [vmem:[#allocation2 + $0x50] sm:$0xff] 0.0
      %58 = vst [vmem:[#allocation2 + $0x58] sm:$0xff] 0.0
      %59 = vst [vmem:[#allocation2 + $0x60] sm:$0xff] 0.0
      %60 = vst [vmem:[#allocation2 + $0x68] sm:$0xff] 0.0
      %61 = vst [vmem:[#allocation2 + $0x70] sm:$0xff] 0.0
      %62 = vst [vmem:[#allocation2 + $0x78] sm:$0xff] 0.0
      %63 = vst [vmem:[#allocation2 + $0x80] sm:$0xff] 0.0
      %64 = vst [vmem:[#allocation2 + $0x88] sm:$0xff] 0.0
      %65 = vst [vmem:[#allocation2 + $0x90] sm:$0xff] 0.0
      %66 = vst [vmem:[#allocation2 + $0x98] sm:$0xff] 0.0
      %67 = vst [vmem:[#allocation2 + $0xa0] sm:$0xff] 0.0
      %68 = vst [vmem:[#allocation2 + $0xa8] sm:$0xff] 0.0
      %69 = vst [vmem:[#allocation2 + $0xb0] sm:$0xff] 0.0
      %70 = vst [vmem:[#allocation2 + $0xb8] sm:$0xff] 0.0
    $region25: #{tpu_custom_call.1} parent=1 // pred_fallthru
      _
    %v71 = vld [vmem:[#allocation2] sm:$0xff]
    %v72 = vld [vmem:[#allocation2 + $0x8] sm:$0xff]
    %v73 = vld [vmem:[#allocation2 + $0x10] sm:$0xff]
    %v74 = vld [vmem:[#allocation2 + $0x18] sm:$0xff]
    %v75 = vld [vmem:[#allocation2 + $0x20] sm:$0xff]
    %v76 = vld [vmem:[#allocation2 + $0x28] sm:$0xff]
    %v77 = vld [vmem:[#allocation2 + $0x30] sm:$0xff]
    %v78 = vld [vmem:[#allocation2 + $0x38] sm:$0xff]
    %v79 = vld [vmem:[#allocation2 + $0x40] sm:$0xff]
    %v80 = vld [vmem:[#allocation2 + $0x48] sm:$0xff]
    %v81 = vld [vmem:[#allocation2 + $0x50] sm:$0xff]
    %v82 = vld [vmem:[#allocation2 + $0x58] sm:$0xff]
    %v83 = vld [vmem:[#allocation2 + $0x60] sm:$0xff]
    %v84 = vld [vmem:[#allocation2 + $0x68] sm:$0xff]
    %v85 = vld [vmem:[#allocation2 + $0x70] sm:$0xff]
    %v86 = vld [vmem:[#allocation2 + $0x78] sm:$0xff]
    %v87 = vld [vmem:[#allocation2 + $0x80] sm:$0xff]
    %v88 = vld [vmem:[#allocation2 + $0x88] sm:$0xff]
    %v89 = vld [vmem:[#allocation2 + $0x90] sm:$0xff]
    %v90 = vld [vmem:[#allocation2 + $0x98] sm:$0xff]
    %v91 = vld [vmem:[#allocation2 + $0xa0] sm:$0xff]
    %v92 = vld [vmem:[#allocation2 + $0xa8] sm:$0xff]
    %v93 = vld [vmem:[#allocation2 + $0xb0] sm:$0xff]
    %v94 = vld [vmem:[#allocation2 + $0xb8] sm:$0xff]
    %v95 = vld [vmem:[#allocation3] sm:$0xff]
    %v96 = vld [vmem:[#allocation3 + $0x8] sm:$0xff]
    %v97 = vld [vmem:[#allocation3 + $0x10] sm:$0xff]
    %v98 = vld [vmem:[#allocation3 + $0x18] sm:$0xff]
    %v99 = vld [vmem:[#allocation3 + $0x20] sm:$0xff]
    %v100 = vld [vmem:[#allocation3 + $0x28] sm:$0xff]
    %v101 = vld [vmem:[#allocation3 + $0x30] sm:$0xff]
    %v102 = vld [vmem:[#allocation3 + $0x38] sm:$0xff]
    %v103 = vld [vmem:[#allocation6] sm:$0xff]
    %v104 = vld [vmem:[#allocation6 + $0x8] sm:$0xff]
    %v105 = vld [vmem:[#allocation6 + $0x10] sm:$0xff]
    %v106 = vld [vmem:[#allocation6 + $0x18] sm:$0xff]
    %v107 = vld [vmem:[#allocation6 + $0x20] sm:$0xff]
    %v108 = vld [vmem:[#allocation6 + $0x28] sm:$0xff]
    %v109 = vld [vmem:[#allocation6 + $0x30] sm:$0xff]
    %v110 = vld [vmem:[#allocation6 + $0x38] sm:$0xff]
    %v111 = vld [vmem:[#allocation6 + $0x40] sm:$0xff]
    %v112 = vld [vmem:[#allocation6 + $0x48] sm:$0xff]
    %v113 = vld [vmem:[#allocation6 + $0x50] sm:$0xff]
    %v114 = vld [vmem:[#allocation6 + $0x58] sm:$0xff]
    %v115 = vld [vmem:[#allocation6 + $0x60] sm:$0xff]
    %v116 = vld [vmem:[#allocation6 + $0x68] sm:$0xff]
    %v117 = vld [vmem:[#allocation6 + $0x70] sm:$0xff]
    %v118 = vld [vmem:[#allocation6 + $0x78] sm:$0xff]
    %v119 = vld [vmem:[#allocation6 + $0x80] sm:$0xff]
    %v120 = vld [vmem:[#allocation6 + $0x88] sm:$0xff]
    %v121 = vld [vmem:[#allocation6 + $0x90] sm:$0xff]
    %v122 = vld [vmem:[#allocation6 + $0x98] sm:$0xff]
    %v123 = vld [vmem:[#allocation6 + $0xa0] sm:$0xff]
    %v124 = vld [vmem:[#allocation6 + $0xa8] sm:$0xff]
    %v125 = vld [vmem:[#allocation6 + $0xb0] sm:$0xff]
    %v126 = vld [vmem:[#allocation6 + $0xb8] sm:$0xff]
    %v127 = vld [vmem:[#allocation6 + $0xc0] sm:$0xff]
    %v128 = vld [vmem:[#allocation6 + $0xc8] sm:$0xff]
    %v129 = vld [vmem:[#allocation6 + $0xd0] sm:$0xff]
    %v130 = vld [vmem:[#allocation6 + $0xd8] sm:$0xff]
    %v131 = vld [vmem:[#allocation6 + $0xe0] sm:$0xff]
    %v132 = vld [vmem:[#allocation6 + $0xe8] sm:$0xff]
    %v133 = vld [vmem:[#allocation6 + $0xf0] sm:$0xff]
    %v134 = vld [vmem:[#allocation6 + $0xf8] sm:$0xff]
    %v135 = vld [vmem:[#allocation6 + $0x100] sm:$0xff]
    %v136 = vld [vmem:[#allocation6 + $0x108] sm:$0xff]
    %v137 = vld [vmem:[#allocation6 + $0x110] sm:$0xff]
    %v138 = vld [vmem:[#allocation6 + $0x118] sm:$0xff]
    %v139 = vld [vmem:[#allocation6 + $0x120] sm:$0xff]
    %v140 = vld [vmem:[#allocation6 + $0x128] sm:$0xff]
    %v141 = vld [vmem:[#allocation6 + $0x130] sm:$0xff]
    %v142 = vld [vmem:[#allocation6 + $0x138] sm:$0xff]
    %v143 = vld [vmem:[#allocation6 + $0x140] sm:$0xff]
    %v144 = vld [vmem:[#allocation6 + $0x148] sm:$0xff]
    %v145 = vld [vmem:[#allocation6 + $0x150] sm:$0xff]
    %v146 = vld [vmem:[#allocation6 + $0x158] sm:$0xff]
    %v147 = vld [vmem:[#allocation6 + $0x160] sm:$0xff]
    %v148 = vld [vmem:[#allocation6 + $0x168] sm:$0xff]
    %v149 = vld [vmem:[#allocation6 + $0x170] sm:$0xff]
    %v150 = vld [vmem:[#allocation6 + $0x178] sm:$0xff]
    %v151 = vld [vmem:[#allocation6 + $0x180] sm:$0xff]
    %v152 = vld [vmem:[#allocation6 + $0x188] sm:$0xff]
    %v153 = vld [vmem:[#allocation6 + $0x190] sm:$0xff]
    %v154 = vld [vmem:[#allocation6 + $0x198] sm:$0xff]
    %v155 = vld [vmem:[#allocation6 + $0x1a0] sm:$0xff]
    %v156 = vld [vmem:[#allocation6 + $0x1a8] sm:$0xff]
    %v157 = vld [vmem:[#allocation6 + $0x1b0] sm:$0xff]
    %v158 = vld [vmem:[#allocation6 + $0x1b8] sm:$0xff]
    %v159 = vld [vmem:[#allocation6 + $0x1c0] sm:$0xff]
    %v160 = vld [vmem:[#allocation6 + $0x1c8] sm:$0xff]
    %v161 = vld [vmem:[#allocation6 + $0x1d0] sm:$0xff]
    %v162 = vld [vmem:[#allocation6 + $0x1d8] sm:$0xff]
    %v163 = vld [vmem:[#allocation6 + $0x1e0] sm:$0xff]
    %v164 = vld [vmem:[#allocation6 + $0x1e8] sm:$0xff]
    %v165 = vld [vmem:[#allocation6 + $0x1f0] sm:$0xff]
    %v166 = vld [vmem:[#allocation6 + $0x1f8] sm:$0xff]
    %v167 = vld [vmem:[#allocation6 + $0x200] sm:$0xff]
    %v168 = vld [vmem:[#allocation6 + $0x208] sm:$0xff]
    %v169 = vld [vmem:[#allocation6 + $0x210] sm:$0xff]
    %v170 = vld [vmem:[#allocation6 + $0x218] sm:$0xff]
    %v171 = vld [vmem:[#allocation6 + $0x220] sm:$0xff]
    %v172 = vld [vmem:[#allocation6 + $0x228] sm:$0xff]
    %v173 = vld [vmem:[#allocation6 + $0x230] sm:$0xff]
    %v174 = vld [vmem:[#allocation6 + $0x238] sm:$0xff]
    %v175 = vld [vmem:[#allocation6 + $0x240] sm:$0xff]
    %v176 = vld [vmem:[#allocation6 + $0x248] sm:$0xff]
    %v177 = vld [vmem:[#allocation6 + $0x250] sm:$0xff]
    %v178 = vld [vmem:[#allocation6 + $0x258] sm:$0xff]
    %v179 = vld [vmem:[#allocation6 + $0x260] sm:$0xff]
    %v180 = vld [vmem:[#allocation6 + $0x268] sm:$0xff]
    %v181 = vld [vmem:[#allocation6 + $0x270] sm:$0xff]
    %v182 = vld [vmem:[#allocation6 + $0x278] sm:$0xff]
    %v183 = vld [vmem:[#allocation6 + $0x280] sm:$0xff]
    %v184 = vld [vmem:[#allocation6 + $0x288] sm:$0xff]
    %v185 = vld [vmem:[#allocation6 + $0x290] sm:$0xff]
    %v186 = vld [vmem:[#allocation6 + $0x298] sm:$0xff]
    %v187 = vld [vmem:[#allocation6 + $0x2a0] sm:$0xff]
    %v188 = vld [vmem:[#allocation6 + $0x2a8] sm:$0xff]
    %v189 = vld [vmem:[#allocation6 + $0x2b0] sm:$0xff]
    %v190 = vld [vmem:[#allocation6 + $0x2b8] sm:$0xff]
    %v191 = vld [vmem:[#allocation6 + $0x2c0] sm:$0xff]
    %v192 = vld [vmem:[#allocation6 + $0x2c8] sm:$0xff]
    %v193 = vld [vmem:[#allocation6 + $0x2d0] sm:$0xff]
    %v194 = vld [vmem:[#allocation6 + $0x2d8] sm:$0xff]
    %v195 = vld [vmem:[#allocation6 + $0x2e0] sm:$0xff]
    %v196 = vld [vmem:[#allocation6 + $0x2e8] sm:$0xff]
    %v197 = vld [vmem:[#allocation6 + $0x2f0] sm:$0xff]
    %v198 = vld [vmem:[#allocation6 + $0x2f8] sm:$0xff]
    %v199 = vld [vmem:[#allocation6 + $0x300] sm:$0xff]
    %v200 = vld [vmem:[#allocation6 + $0x308] sm:$0xff]
    %v201 = vld [vmem:[#allocation6 + $0x310] sm:$0xff]
    %v202 = vld [vmem:[#allocation6 + $0x318] sm:$0xff]
    %v203 = vld [vmem:[#allocation6 + $0x320] sm:$0xff]
    %v204 = vld [vmem:[#allocation6 + $0x328] sm:$0xff]
    %v205 = vld [vmem:[#allocation6 + $0x330] sm:$0xff]
    %v206 = vld [vmem:[#allocation6 + $0x338] sm:$0xff]
    %v207 = vld [vmem:[#allocation6 + $0x340] sm:$0xff]
    %v208 = vld [vmem:[#allocation6 + $0x348] sm:$0xff]
    %v209 = vld [vmem:[#allocation6 + $0x350] sm:$0xff]
    %v210 = vld [vmem:[#allocation6 + $0x358] sm:$0xff]
    %v211 = vld [vmem:[#allocation6 + $0x360] sm:$0xff]
    %v212 = vld [vmem:[#allocation6 + $0x368] sm:$0xff]
    %v213 = vld [vmem:[#allocation6 + $0x370] sm:$0xff]
    %v214 = vld [vmem:[#allocation6 + $0x378] sm:$0xff]
    %v215 = vld [vmem:[#allocation6 + $0x380] sm:$0xff]
    %v216 = vld [vmem:[#allocation6 + $0x388] sm:$0xff]
    %v217 = vld [vmem:[#allocation6 + $0x390] sm:$0xff]
    %v218 = vld [vmem:[#allocation6 + $0x398] sm:$0xff]
    %v219 = vld [vmem:[#allocation6 + $0x3a0] sm:$0xff]
    %v220 = vld [vmem:[#allocation6 + $0x3a8] sm:$0xff]
    %v221 = vld [vmem:[#allocation6 + $0x3b0] sm:$0xff]
    %v222 = vld [vmem:[#allocation6 + $0x3b8] sm:$0xff]
    %v223 = vld [vmem:[#allocation6 + $0x3c0] sm:$0xff]
    %v224 = vld [vmem:[#allocation6 + $0x3c8] sm:$0xff]
    %v225 = vld [vmem:[#allocation6 + $0x3d0] sm:$0xff]
    %v226 = vld [vmem:[#allocation6 + $0x3d8] sm:$0xff]
    %v227 = vld [vmem:[#allocation6 + $0x3e0] sm:$0xff]
    %v228 = vld [vmem:[#allocation6 + $0x3e8] sm:$0xff]
    %v229 = vld [vmem:[#allocation6 + $0x3f0] sm:$0xff]
    %v230 = vld [vmem:[#allocation6 + $0x3f8] sm:$0xff]
    %v231 = vld [vmem:[#allocation6 + $0x400] sm:$0xff]
    %v232 = vld [vmem:[#allocation6 + $0x408] sm:$0xff]
    %v233 = vld [vmem:[#allocation6 + $0x410] sm:$0xff]
    %v234 = vld [vmem:[#allocation6 + $0x418] sm:$0xff]
    %v235 = vld [vmem:[#allocation6 + $0x420] sm:$0xff]
    %v236 = vld [vmem:[#allocation6 + $0x428] sm:$0xff]
    %v237 = vld [vmem:[#allocation6 + $0x430] sm:$0xff]
    %v238 = vld [vmem:[#allocation6 + $0x438] sm:$0xff]
    %v239 = vld [vmem:[#allocation6 + $0x440] sm:$0xff]
    %v240 = vld [vmem:[#allocation6 + $0x448] sm:$0xff]
    %v241 = vld [vmem:[#allocation6 + $0x450] sm:$0xff]
    %v242 = vld [vmem:[#allocation6 + $0x458] sm:$0xff]
    %v243 = vld [vmem:[#allocation6 + $0x460] sm:$0xff]
    %v244 = vld [vmem:[#allocation6 + $0x468] sm:$0xff]
    %v245 = vld [vmem:[#allocation6 + $0x470] sm:$0xff]
    %v246 = vld [vmem:[#allocation6 + $0x478] sm:$0xff]
    %v247 = vld [vmem:[#allocation6 + $0x480] sm:$0xff]
    %v248 = vld [vmem:[#allocation6 + $0x488] sm:$0xff]
    %v249 = vld [vmem:[#allocation6 + $0x490] sm:$0xff]
    %v250 = vld [vmem:[#allocation6 + $0x498] sm:$0xff]
    %v251 = vld [vmem:[#allocation6 + $0x4a0] sm:$0xff]
    %v252 = vld [vmem:[#allocation6 + $0x4a8] sm:$0xff]
    %v253 = vld [vmem:[#allocation6 + $0x4b0] sm:$0xff]
    %v254 = vld [vmem:[#allocation6 + $0x4b8] sm:$0xff]
    %v255 = vld [vmem:[#allocation6 + $0x4c0] sm:$0xff]
    %v256 = vld [vmem:[#allocation6 + $0x4c8] sm:$0xff]
    %v257 = vld [vmem:[#allocation6 + $0x4d0] sm:$0xff]
    %v258 = vld [vmem:[#allocation6 + $0x4d8] sm:$0xff]
    %v259 = vld [vmem:[#allocation6 + $0x4e0] sm:$0xff]
    %v260 = vld [vmem:[#allocation6 + $0x4e8] sm:$0xff]
    %v261 = vld [vmem:[#allocation6 + $0x4f0] sm:$0xff]
    %v262 = vld [vmem:[#allocation6 + $0x4f8] sm:$0xff]
    %v263 = vld [vmem:[#allocation6 + $0x500] sm:$0xff]
    %v264 = vld [vmem:[#allocation6 + $0x508] sm:$0xff]
    %v265 = vld [vmem:[#allocation6 + $0x510] sm:$0xff]
    %v266 = vld [vmem:[#allocation6 + $0x518] sm:$0xff]
    %v267 = vld [vmem:[#allocation6 + $0x520] sm:$0xff]
    %v268 = vld [vmem:[#allocation6 + $0x528] sm:$0xff]
    %v269 = vld [vmem:[#allocation6 + $0x530] sm:$0xff]
    %v270 = vld [vmem:[#allocation6 + $0x538] sm:$0xff]
    %v271 = vld [vmem:[#allocation6 + $0x540] sm:$0xff]
    %v272 = vld [vmem:[#allocation6 + $0x548] sm:$0xff]
    %v273 = vld [vmem:[#allocation6 + $0x550] sm:$0xff]
    %v274 = vld [vmem:[#allocation6 + $0x558] sm:$0xff]
    %v275 = vld [vmem:[#allocation6 + $0x560] sm:$0xff]
    %v276 = vld [vmem:[#allocation6 + $0x568] sm:$0xff]
    %v277 = vld [vmem:[#allocation6 + $0x570] sm:$0xff]
    %v278 = vld [vmem:[#allocation6 + $0x578] sm:$0xff]
    %v279 = vld [vmem:[#allocation6 + $0x580] sm:$0xff]
    %v280 = vld [vmem:[#allocation6 + $0x588] sm:$0xff]
    %v281 = vld [vmem:[#allocation6 + $0x590] sm:$0xff]
    %v282 = vld [vmem:[#allocation6 + $0x598] sm:$0xff]
    %v283 = vld [vmem:[#allocation6 + $0x5a0] sm:$0xff]
    %v284 = vld [vmem:[#allocation6 + $0x5a8] sm:$0xff]
    %v285 = vld [vmem:[#allocation6 + $0x5b0] sm:$0xff]
    %v286 = vld [vmem:[#allocation6 + $0x5b8] sm:$0xff]
    %v287 = vld [vmem:[#allocation6 + $0x5c0] sm:$0xff]
    %v288 = vld [vmem:[#allocation6 + $0x5c8] sm:$0xff]
    %v289 = vld [vmem:[#allocation6 + $0x5d0] sm:$0xff]
    %v290 = vld [vmem:[#allocation6 + $0x5d8] sm:$0xff]
    %v291 = vld [vmem:[#allocation6 + $0x5e0] sm:$0xff]
    %v292 = vld [vmem:[#allocation6 + $0x5e8] sm:$0xff]
    %v293 = vld [vmem:[#allocation6 + $0x5f0] sm:$0xff]
    %v294 = vld [vmem:[#allocation6 + $0x5f8] sm:$0xff]
    %295 = vmatprep.subr.mxu0 %v104
    %296 = vmatpush1.msra.mxu0 %v103
    %297 = vmatprep.subr.mxu0 %v110
    %298 = vmatpush1.msra.mxu0 %v109
    %299 = vmatprep.subr.mxu0 %v116
    %300 = vmatpush1.msra.mxu0 %v115
    %301 = vmatprep.subr.mxu0 %v122
    %302 = vmatpush1.msra.mxu0 %v121
    %303 = vmatprep.subr.mxu0 %v128
    %304 = vmatpush1.msra.mxu0 %v127
    %305 = vmatprep.subr.mxu0 %v134
    %306 = vmatpush1.msra.mxu0 %v133
    %307 = vmatprep.subr.mxu0 %v140
    %308 = vmatpush1.msra.mxu0 %v139
    %309 = vmatprep.subr.mxu0 %v146
    %310 = vmatpush1.msra.mxu0 %v145
    %311 = vmatprep.subr.mxu0 %v152
    %312 = vmatpush1.msra.mxu0 %v151
    %313 = vmatprep.subr.mxu0 %v158
    %314 = vmatpush1.msra.mxu0 %v157
    %315 = vmatprep.subr.mxu0 %v164
    %316 = vmatpush1.msra.mxu0 %v163
    %317 = vmatprep.subr.mxu0 %v170
    %318 = vmatpush1.msra.mxu0 %v169
    %319 = vmatprep.subr.mxu0 %v176
    %320 = vmatpush1.msra.mxu0 %v175
    %321 = vmatprep.subr.mxu0 %v182
    %322 = vmatpush1.msra.mxu0 %v181
    %323 = vmatprep.subr.mxu0 %v188
    %324 = vmatpush1.msra.mxu0 %v187
    %325 = vmatprep.subr.mxu0 %v194
    %326 = vmatpush1.msra.mxu0 %v193
    %327 = vmatprep.subr.mxu0 %v200
    %328 = vmatpush1.msra.mxu0 %v199
    %329 = vmatprep.subr.mxu0 %v206
    %330 = vmatpush1.msra.mxu0 %v205
    %331 = vmatprep.subr.mxu0 %v212
    %332 = vmatpush1.msra.mxu0 %v211
    %333 = vmatprep.subr.mxu0 %v218
    %334 = vmatpush1.msra.mxu0 %v217
    %335 = vmatprep.subr.mxu0 %v224
    %336 = vmatpush1.msra.mxu0 %v223
    %337 = vmatprep.subr.mxu0 %v230
    %338 = vmatpush1.msra.mxu0 %v229
    %339 = vmatprep.subr.mxu0 %v236
    %340 = vmatpush1.msra.mxu0 %v235
    %341 = vmatprep.subr.mxu0 %v242
    %342 = vmatpush1.msra.mxu0 %v241
    %343 = vmatprep.subr.mxu0 %v248
    %344 = vmatpush1.msra.mxu0 %v247
    %345 = vmatprep.subr.mxu0 %v254
    %346 = vmatpush1.msra.mxu0 %v253
    %347 = vmatprep.subr.mxu0 %v260
    %348 = vmatpush1.msra.mxu0 %v259
    %349 = vmatprep.subr.mxu0 %v266
    %350 = vmatpush1.msra.mxu0 %v265
    %351 = vmatprep.subr.mxu0 %v272
    %352 = vmatpush1.msra.mxu0 %v271
    %353 = vmatprep.subr.mxu0 %v278
    %354 = vmatpush1.msra.mxu0 %v277
    %355 = vmatprep.subr.mxu0 %v284
    %356 = vmatpush1.msra.mxu0 %v283
    %357 = vmatprep.subr.mxu0 %v290
    %358 = vmatpush1.msra.mxu0 %v289
    %359 = vmatprep.mubr.f32.mxu0 %v96
    %360 = vmatmul.mubr.f32.gmra.mrb[0].mxu0 %v95
    %v361 = vpop.f32.mrb[0].mxu0
    %v362 = vadd.f32 0.0, %v361
    %v363 = vpop.f32.mrb[0].mxu0
    %v364 = vadd.f32 0.0, %v363
    %365 = vmatprep.mubr.f32.mxu0 %v98
    %366 = vmatmul.mubr.f32.gmra.mrb[0].mxu0 %v97
    %v367 = vpop.f32.mrb[0].mxu0
    %v368 = vadd.f32 0.0, %v367
    %v369 = vpop.f32.mrb[0].mxu0
    %v370 = vadd.f32 0.0, %v369
    %371 = vmatprep.mubr.f32.mxu0 %v100
    %372 = vmatmul.mubr.f32.gmra.mrb[0].mxu0 %v99
    %v373 = vpop.f32.mrb[0].mxu0
    %v374 = vadd.f32 0.0, %v373
    %v375 = vpop.f32.mrb[0].mxu0
    %v376 = vadd.f32 0.0, %v375
    %377 = vmatprep.mubr.f32.mxu0 %v102
    %378 = vmatmul.mubr.f32.gmra.mrb[0].mxu0 %v101
    %v379 = vpop.f32.mrb[0].mxu0
    %v380 = vadd.f32 0.0, %v379
    %v381 = vpop.f32.mrb[0].mxu0
    %v382 = vadd.f32 0.0, %v381
    %383 = vdwg.mxu0
    %384 = vmatprep.subr.mxu0 %v106
    %385 = vmatpush1.msra.mxu0 %v105
    %386 = vmatprep.subr.mxu0 %v112
    %387 = vmatpush1.msra.mxu0 %v111
    %388 = vmatprep.subr.mxu0 %v118
    %389 = vmatpush1.msra.mxu0 %v117
    %390 = vmatprep.subr.mxu0 %v124
    %391 = vmatpush1.msra.mxu0 %v123
    %392 = vmatprep.subr.mxu0 %v130
    %393 = vmatpush1.msra.mxu0 %v129
    %394 = vmatprep.subr.mxu0 %v136
    %395 = vmatpush1.msra.mxu0 %v135
    %396 = vmatprep.subr.mxu0 %v142
    %397 = vmatpush1.msra.mxu0 %v141
    %398 = vmatprep.subr.mxu0 %v148
    %399 = vmatpush1.msra.mxu0 %v147
    %400 = vmatprep.subr.mxu0 %v154
    %401 = vmatpush1.msra.mxu0 %v153
    %402 = vmatprep.subr.mxu0 %v160
    %403 = vmatpush1.msra.mxu0 %v159
    %404 = vmatprep.subr.mxu0 %v166
    %405 = vmatpush1.msra.mxu0 %v165
    %406 = vmatprep.subr.mxu0 %v172
    %407 = vmatpush1.msra.mxu0 %v171
    %408 = vmatprep.subr.mxu0 %v178
    %409 = vmatpush1.msra.mxu0 %v177
    %410 = vmatprep.subr.mxu0 %v184
    %411 = vmatpush1.msra.mxu0 %v183
    %412 = vmatprep.subr.mxu0 %v190
    %413 = vmatpush1.msra.mxu0 %v189
    %414 = vmatprep.subr.mxu0 %v196
    %415 = vmatpush1.msra.mxu0 %v195
    %416 = vmatprep.subr.mxu0 %v202
    %417 = vmatpush1.msra.mxu0 %v201
    %418 = vmatprep.subr.mxu0 %v208
    %419 = vmatpush1.msra.mxu0 %v207
    %420 = vmatprep.subr.mxu0 %v214
    %421 = vmatpush1.msra.mxu0 %v213
    %422 = vmatprep.subr.mxu0 %v220
    %423 = vmatpush1.msra.mxu0 %v219
    %424 = vmatprep.subr.mxu0 %v226
    %425 = vmatpush1.msra.mxu0 %v225
    %426 = vmatprep.subr.mxu0 %v232
    %427 = vmatpush1.msra.mxu0 %v231
    %428 = vmatprep.subr.mxu0 %v238
    %429 = vmatpush1.msra.mxu0 %v237
    %430 = vmatprep.subr.mxu0 %v244
    %431 = vmatpush1.msra.mxu0 %v243
    %432 = vmatprep.subr.mxu0 %v250
    %433 = vmatpush1.msra.mxu0 %v249
    %434 = vmatprep.subr.mxu0 %v256
    %435 = vmatpush1.msra.mxu0 %v255
    %436 = vmatprep.subr.mxu0 %v262
    %437 = vmatpush1.msra.mxu0 %v261
    %438 = vmatprep.subr.mxu0 %v268
    %439 = vmatpush1.msra.mxu0 %v267
    %440 = vmatprep.subr.mxu0 %v274
    %441 = vmatpush1.msra.mxu0 %v273
    %442 = vmatprep.subr.mxu0 %v280
    %443 = vmatpush1.msra.mxu0 %v279
    %444 = vmatprep.subr.mxu0 %v286
    %445 = vmatpush1.msra.mxu0 %v285
    %446 = vmatprep.subr.mxu0 %v292
    %447 = vmatpush1.msra.mxu0 %v291
    %448 = vmatprep.mubr.f32.mxu0 %v96
    %449 = vmatmul.mubr.f32.gmra.mrb[0].mxu0 %v95
    %v450 = vpop.f32.mrb[0].mxu0
    %v451 = vadd.f32 0.0, %v450
    %v452 = vpop.f32.mrb[0].mxu0
    %v453 = vadd.f32 0.0, %v452
    %454 = vmatprep.mubr.f32.mxu0 %v98
    %455 = vmatmul.mubr.f32.gmra.mrb[0].mxu0 %v97
    %v456 = vpop.f32.mrb[0].mxu0
    %v457 = vadd.f32 0.0, %v456
    %v458 = vpop.f32.mrb[0].mxu0
    %v459 = vadd.f32 0.0, %v458
    %460 = vmatprep.mubr.f32.mxu0 %v100
    %461 = vmatmul.mubr.f32.gmra.mrb[0].mxu0 %v99
    %v462 = vpop.f32.mrb[0].mxu0
    %v463 = vadd.f32 0.0, %v462
    %v464 = vpop.f32.mrb[0].mxu0
    %v465 = vadd.f32 0.0, %v464
    %466 = vmatprep.mubr.f32.mxu0 %v102
    %467 = vmatmul.mubr.f32.gmra.mrb[0].mxu0 %v101
    %v468 = vpop.f32.mrb[0].mxu0
    %v469 = vadd.f32 0.0, %v468
    %v470 = vpop.f32.mrb[0].mxu0
    %v471 = vadd.f32 0.0, %v470
    %472 = vdwg.mxu0
    %473 = vmatprep.subr.mxu0 %v108
    %474 = vmatpush1.msra.mxu0 %v107
    %475 = vmatprep.subr.mxu0 %v114
    %476 = vmatpush1.msra.mxu0 %v113
    %477 = vmatprep.subr.mxu0 %v120
    %478 = vmatpush1.msra.mxu0 %v119
    %479 = vmatprep.subr.mxu0 %v126
    %480 = vmatpush1.msra.mxu0 %v125
    %481 = vmatprep.subr.mxu0 %v132
    %482 = vmatpush1.msra.mxu0 %v131
    %483 = vmatprep.subr.mxu0 %v138
    %484 = vmatpush1.msra.mxu0 %v137
    %485 = vmatprep.subr.mxu0 %v144
    %486 = vmatpush1.msra.mxu0 %v143
    %487 = vmatprep.subr.mxu0 %v150
    %488 = vmatpush1.msra.mxu0 %v149
    %489 = vmatprep.subr.mxu0 %v156
    %490 = vmatpush1.msra.mxu0 %v155
    %491 = vmatprep.subr.mxu0 %v162
    %492 = vmatpush1.msra.mxu0 %v161
    %493 = vmatprep.subr.mxu0 %v168
    %494 = vmatpush1.msra.mxu0 %v167
    %495 = vmatprep.subr.mxu0 %v174
    %496 = vmatpush1.msra.mxu0 %v173
    %497 = vmatprep.subr.mxu0 %v180
    %498 = vmatpush1.msra.mxu0 %v179
    %499 = vmatprep.subr.mxu0 %v186
    %500 = vmatpush1.msra.mxu0 %v185
    %501 = vmatprep.subr.mxu0 %v192
    %502 = vmatpush1.msra.mxu0 %v191
    %503 = vmatprep.subr.mxu0 %v198
    %504 = vmatpush1.msra.mxu0 %v197
    %505 = vmatprep.subr.mxu0 %v204
    %506 = vmatpush1.msra.mxu0 %v203
    %507 = vmatprep.subr.mxu0 %v210
    %508 = vmatpush1.msra.mxu0 %v209
    %509 = vmatprep.subr.mxu0 %v216
    %510 = vmatpush1.msra.mxu0 %v215
    %511 = vmatprep.subr.mxu0 %v222
    %512 = vmatpush1.msra.mxu0 %v221
    %513 = vmatprep.subr.mxu0 %v228
    %514 = vmatpush1.msra.mxu0 %v227
    %515 = vmatprep.subr.mxu0 %v234
    %516 = vmatpush1.msra.mxu0 %v233
    %517 = vmatprep.subr.mxu0 %v240
    %518 = vmatpush1.msra.mxu0 %v239
    %519 = vmatprep.subr.mxu0 %v246
    %520 = vmatpush1.msra.mxu0 %v245
    %521 = vmatprep.subr.mxu0 %v252
    %522 = vmatpush1.msra.mxu0 %v251
    %523 = vmatprep.subr.mxu0 %v258
    %524 = vmatpush1.msra.mxu0 %v257
    %525 = vmatprep.subr.mxu0 %v264
    %526 = vmatpush1.msra.mxu0 %v263
    %527 = vmatprep.subr.mxu0 %v270
    %528 = vmatpush1.msra.mxu0 %v269
    %529 = vmatprep.subr.mxu0 %v276
    %530 = vmatpush1.msra.mxu0 %v275
    %531 = vmatprep.subr.mxu0 %v282
    %532 = vmatpush1.msra.mxu0 %v281
    %533 = vmatprep.subr.mxu0 %v288
    %534 = vmatpush1.msra.mxu0 %v287
    %535 = vmatprep.subr.mxu0 %v294
    %536 = vmatpush1.msra.mxu0 %v293
    %537 = vmatprep.mubr.f32.mxu0 %v96
    %538 = vmatmul.mubr.f32.gmra.mrb[0].mxu0 %v95
    %v539 = vpop.f32.mrb[0].mxu0
    %v540 = vadd.f32 0.0, %v539
    %v541 = vpop.f32.mrb[0].mxu0
    %v542 = vadd.f32 0.0, %v541
    %543 = vmatprep.mubr.f32.mxu0 %v98
    %544 = vmatmul.mubr.f32.gmra.mrb[0].mxu0 %v97
    %v545 = vpop.f32.mrb[0].mxu0
    %v546 = vadd.f32 0.0, %v545
    %v547 = vpop.f32.mrb[0].mxu0
    %v548 = vadd.f32 0.0, %v547
    %549 = vmatprep.mubr.f32.mxu0 %v100
    %550 = vmatmul.mubr.f32.gmra.mrb[0].mxu0 %v99
    %v551 = vpop.f32.mrb[0].mxu0
    %v552 = vadd.f32 0.0, %v551
    %v553 = vpop.f32.mrb[0].mxu0
    %v554 = vadd.f32 0.0, %v553
    %555 = vmatprep.mubr.f32.mxu0 %v102
    %556 = vmatmul.mubr.f32.gmra.mrb[0].mxu0 %v101
    %v557 = vpop.f32.mrb[0].mxu0
    %v558 = vadd.f32 0.0, %v557
    %v559 = vpop.f32.mrb[0].mxu0
    %v560 = vadd.f32 0.0, %v559
    %561 = vdwg.mxu0
    %v562 = vadd.f32 %v71, %v362
    %v563 = vadd.f32 %v72, %v364
    %v564 = vadd.f32 %v73, %v451
    %v565 = vadd.f32 %v74, %v453
    %v566 = vadd.f32 %v75, %v540
    %v567 = vadd.f32 %v76, %v542
    %v568 = vadd.f32 %v77, %v368
    %v569 = vadd.f32 %v78, %v370
    %v570 = vadd.f32 %v79, %v457
    %v571 = vadd.f32 %v80, %v459
    %v572 = vadd.f32 %v81, %v546
    %v573 = vadd.f32 %v82, %v548
    %v574 = vadd.f32 %v83, %v374
    %v575 = vadd.f32 %v84, %v376
    %v576 = vadd.f32 %v85, %v463
    %v577 = vadd.f32 %v86, %v465
    %v578 = vadd.f32 %v87, %v552
    %v579 = vadd.f32 %v88, %v554
    %v580 = vadd.f32 %v89, %v380
    %v581 = vadd.f32 %v90, %v382
    %v582 = vadd.f32 %v91, %v469
    %v583 = vadd.f32 %v92, %v471
    %v584 = vadd.f32 %v93, %v558
    %v585 = vadd.f32 %v94, %v560
    %586 = vst [vmem:[#allocation2] sm:$0xff] %v562
    %587 = vst [vmem:[#allocation2 + $0x8] sm:$0xff] %v563
    %588 = vst [vmem:[#allocation2 + $0x10] sm:$0xff] %v564
    %589 = vst [vmem:[#allocation2 + $0x18] sm:$0xff] %v565
    %590 = vst [vmem:[#allocation2 + $0x20] sm:$0xff] %v566
    %591 = vst [vmem:[#allocation2 + $0x28] sm:$0xff] %v567
    %592 = vst [vmem:[#allocation2 + $0x30] sm:$0xff] %v568
    %593 = vst [vmem:[#allocation2 + $0x38] sm:$0xff] %v569
    %594 = vst [vmem:[#allocation2 + $0x40] sm:$0xff] %v570
    %595 = vst [vmem:[#allocation2 + $0x48] sm:$0xff] %v571
    %596 = vst [vmem:[#allocation2 + $0x50] sm:$0xff] %v572
    %597 = vst [vmem:[#allocation2 + $0x58] sm:$0xff] %v573
    %598 = vst [vmem:[#allocation2 + $0x60] sm:$0xff] %v574
    %599 = vst [vmem:[#allocation2 + $0x68] sm:$0xff] %v575
    %600 = vst [vmem:[#allocation2 + $0x70] sm:$0xff] %v576
    %601 = vst [vmem:[#allocation2 + $0x78] sm:$0xff] %v577
    %602 = vst [vmem:[#allocation2 + $0x80] sm:$0xff] %v578
    %603 = vst [vmem:[#allocation2 + $0x88] sm:$0xff] %v579
    %604 = vst [vmem:[#allocation2 + $0x90] sm:$0xff] %v580
    %605 = vst [vmem:[#allocation2 + $0x98] sm:$0xff] %v581
    %606 = vst [vmem:[#allocation2 + $0xa0] sm:$0xff] %v582
    %607 = vst [vmem:[#allocation2 + $0xa8] sm:$0xff] %v583
    %608 = vst [vmem:[#allocation2 + $0xb0] sm:$0xff] %v584
    %609 = vst [vmem:[#allocation2 + $0xb8] sm:$0xff] %v585
    // Predicated region
    $region26: #{tpu_custom_call.1} parent=1 // pred_check
      %p610 = pneg %p43
    $region27: #{tpu_custom_call.1} parent=1 // pred_check_branch
      %612 = sbr.rel (%p610) target = $region29
    $region28: #{tpu_custom_call.1} parent=1 // pred_region
      %v613 = vld [vmem:[#allocation2] sm:$0xff]
      %v614 = vld [vmem:[#allocation2 + $0x8] sm:$0xff]
      %v615 = vld [vmem:[#allocation2 + $0x10] sm:$0xff]
      %v616 = vld [vmem:[#allocation2 + $0x18] sm:$0xff]
      %v617 = vld [vmem:[#allocation2 + $0x20] sm:$0xff]
      %v618 = vld [vmem:[#allocation2 + $0x28] sm:$0xff]
      %v619 = vld [vmem:[#allocation2 + $0x30] sm:$0xff]
      %v620 = vld [vmem:[#allocation2 + $0x38] sm:$0xff]
      %v621 = vld [vmem:[#allocation2 + $0x40] sm:$0xff]
      %v622 = vld [vmem:[#allocation2 + $0x48] sm:$0xff]
      %v623 = vld [vmem:[#allocation2 + $0x50] sm:$0xff]
      %v624 = vld [vmem:[#allocation2 + $0x58] sm:$0xff]
      %v625 = vld [vmem:[#allocation2 + $0x60] sm:$0xff]
      %v626 = vld [vmem:[#allocation2 + $0x68] sm:$0xff]
      %v627 = vld [vmem:[#allocation2 + $0x70] sm:$0xff]
      %v628 = vld [vmem:[#allocation2 + $0x78] sm:$0xff]
      %v629 = vld [vmem:[#allocation2 + $0x80] sm:$0xff]
      %v630 = vld [vmem:[#allocation2 + $0x88] sm:$0xff]
      %v631 = vld [vmem:[#allocation2 + $0x90] sm:$0xff]
      %v632 = vld [vmem:[#allocation2 + $0x98] sm:$0xff]
      %v633 = vld [vmem:[#allocation2 + $0xa0] sm:$0xff]
      %v634 = vld [vmem:[#allocation2 + $0xa8] sm:$0xff]
      %v635 = vld [vmem:[#allocation2 + $0xb0] sm:$0xff]
      %v636 = vld [vmem:[#allocation2 + $0xb8] sm:$0xff]
      %v637 = vld [vmem:[%s2] sm:$0x3f]
      %v639 = vlaneseq
      %v640 = vshrl.u32 %v639, 7
      %v641 = vsub.s32 0, %v640
      %v642 = vrot.slane %v637, %v641
      %v643 = vlaneseq
      %v644 = vshrl.u32 %v643, 7
      %v645 = vsub.s32 1, %v644
      %v646 = vrot.slane %v637, %v645
      %v647 = vlaneseq
      %v648 = vshrl.u32 %v647, 7
      %v649 = vsub.s32 2, %v648
      %v650 = vrot.slane %v637, %v649
      %v651 = vlaneseq
      %v652 = vshrl.u32 %v651, 7
      %v653 = vsub.s32 3, %v652
      %v654 = vrot.slane %v637, %v653
      %v655 = vlaneseq
      %v656 = vshrl.u32 %v655, 7
      %v657 = vsub.s32 4, %v656
      %v658 = vrot.slane %v637, %v657
      %v659 = vlaneseq
      %v660 = vshrl.u32 %v659, 7
      %v661 = vsub.s32 5, %v660
      %v662 = vrot.slane %v637, %v661
      %v669 = vadd.f32 %v613, %v642
      %v670 = vadd.f32 %v614, %v646
      %v671 = vadd.f32 %v615, %v650
      %v672 = vadd.f32 %v616, %v654
      %v673 = vadd.f32 %v617, %v658
      %v674 = vadd.f32 %v618, %v662
      %v675 = vadd.f32 %v619, %v642
      %v676 = vadd.f32 %v620, %v646
      %v677 = vadd.f32 %v621, %v650
      %v678 = vadd.f32 %v622, %v654
      %v679 = vadd.f32 %v623, %v658
      %v680 = vadd.f32 %v624, %v662
      %v681 = vadd.f32 %v625, %v642
      %v682 = vadd.f32 %v626, %v646
      %v683 = vadd.f32 %v627, %v650
      %v684 = vadd.f32 %v628, %v654
      %v685 = vadd.f32 %v629, %v658
      %v686 = vadd.f32 %v630, %v662
      %v687 = vadd.f32 %v631, %v642
      %v688 = vadd.f32 %v632, %v646
      %v689 = vadd.f32 %v633, %v650
      %v690 = vadd.f32 %v634, %v654
      %v691 = vadd.f32 %v635, %v658
      %v692 = vadd.f32 %v636, %v662
      %693 = vst [vmem:[#allocation8] sm:$0xff] %v669
      %694 = vst [vmem:[#allocation8 + $0x8] sm:$0xff] %v670
      %695 = vst [vmem:[#allocation8 + $0x10] sm:$0xff] %v671
      %696 = vst [vmem:[#allocation8 + $0x18] sm:$0xff] %v672
      %697 = vst [vmem:[#allocation8 + $0x20] sm:$0xff] %v673
      %698 = vst [vmem:[#allocation8 + $0x28] sm:$0xff] %v674
      %699 = vst [vmem:[#allocation8 + $0x30] sm:$0xff] %v675
      %700 = vst [vmem:[#allocation8 + $0x38] sm:$0xff] %v676
      %701 = vst [vmem:[#allocation8 + $0x40] sm:$0xff] %v677
      %702 = vst [vmem:[#allocation8 + $0x48] sm:$0xff] %v678
      %703 = vst [vmem:[#allocation8 + $0x50] sm:$0xff] %v679
      %704 = vst [vmem:[#allocation8 + $0x58] sm:$0xff] %v680
      %705 = vst [vmem:[#allocation8 + $0x60] sm:$0xff] %v681
      %706 = vst [vmem:[#allocation8 + $0x68] sm:$0xff] %v682
      %707 = vst [vmem:[#allocation8 + $0x70] sm:$0xff] %v683
      %708 = vst [vmem:[#allocation8 + $0x78] sm:$0xff] %v684
      %709 = vst [vmem:[#allocation8 + $0x80] sm:$0xff] %v685
      %710 = vst [vmem:[#allocation8 + $0x88] sm:$0xff] %v686
      %711 = vst [vmem:[#allocation8 + $0x90] sm:$0xff] %v687
      %712 = vst [vmem:[#allocation8 + $0x98] sm:$0xff] %v688
      %713 = vst [vmem:[#allocation8 + $0xa0] sm:$0xff] %v689
      %714 = vst [vmem:[#allocation8 + $0xa8] sm:$0xff] %v690
      %715 = vst [vmem:[#allocation8 + $0xb0] sm:$0xff] %v691
      %716 = vst [vmem:[#allocation8 + $0xb8] sm:$0xff] %v692
    $region29: #{tpu_custom_call.1} parent=1 // pred_fallthru
      _
    // Predicated region
    $region30: #{tpu_custom_call.1} parent=1 // pred_check
      _
    $region31: #{tpu_custom_call.1} parent=1 // pred_check_branch
      %718 = sbr.rel (0) target = $region33
    $region32: #{tpu_custom_call.1} parent=1 // pred_region
      %s720 = ssub.s32 3072, 3072
      %721 = vsyncadd [#allocation5], %s720
      %s722 = sshll.u32 [#allocation8], 4
      %s723 = int_to_ptr.vmem [resolvable:$true] %s722
      %728 = dma.vmem_to_hbm [thread:$0]  %s723, 3072, %s3, [#allocation5], 768, 768, 48
    $region33: #{tpu_custom_call.1} parent=1 // pred_fallthru
      _
    // Predicated region
    $region34: #{tpu_custom_call.1} parent=1 // pred_check
      _
    $region35: #{tpu_custom_call.1} parent=1 // pred_check_branch
      %730 = sbr.rel (0) target = $region37
    $region36: #{tpu_custom_call.1} parent=1 // pred_region
      %731 = dma.done [#allocation5], 3072
    $region37: #{tpu_custom_call.1} parent=1 // pred_fallthru
      _
    %732 = vsyncpa [#allocation4], 1
    %733 = vsyncpa [#allocation7], 1
    %734 = vsyncpa [#allocation5], 1

</llo_original>
